<compile_context>
chip_gen: v6e
topology: v6e:2x2x1
jax: 0.10.0
libtpu: 0.0.40
codegen_flags: <defaults>
</compile_context>

<pallas_src>
import functools

import jax
import jax.numpy as jnp
from jax.experimental import pallas as pl
from jax.experimental.pallas import tpu as pltpu

TEMPERATURE = 1.0


def _self_attn_kernel(x_ref, o_ref, *, inv_temperature, compute_dtype):
    # x_ref block: (TB, T, D); o_ref block: (TB, D)
    x = x_ref[...]
    xc = x if x.dtype == compute_dtype else x.astype(compute_dtype)

    # q = max over the sequence axis; 1/temperature folded into the (TB, D) q
    # tensor and elided entirely when temperature == 1.0.
    q = jnp.max(xc, axis=1)                                            # (TB, D)
    if inv_temperature != 1.0:
        q = q * jnp.asarray(inv_temperature, dtype=q.dtype)

    # Scores s[b, t] = sum_d x[b, t, d] * q[b, d] -> lane-dense (TB, T).
    # Multiply in the compute dtype, accumulate in f32 via the reduction dtype.
    s = jnp.sum(xc * q[:, None, :], axis=2, dtype=jnp.float32)         # (TB, T)

    # Numerically stable softmax numerator over the sequence (lane) axis.
    m = jnp.max(s, axis=1, keepdims=True)                              # (TB, 1)
    e = jnp.exp(s - m)                                                 # (TB, T)
    denom = jnp.sum(e, axis=1, keepdims=True)                          # (TB, 1)

    # Un-normalized output: out_u[b, d] = sum_t e[b, t] * x[b, t, d].
    pe = e.astype(compute_dtype)                                       # (TB, T)
    out_u = jnp.sum(pe[:, :, None] * xc, axis=1, dtype=jnp.float32)    # (TB, D)

    # Deferred normalization on the small (TB, D) tile. Exact reciprocal: one
    # EUP op on a (TB, 1) tensor, so approx=True buys nothing here.
    out = out_u * pl.reciprocal(denom, approx=False)
    o_ref[...] = out.astype(o_ref.dtype)


def _compute_dtype_for(x_dtype):
    """f32 inputs stay f32; low-precision inputs upcast once only on v5e."""
    if jnp.dtype(x_dtype) == jnp.dtype(jnp.float32):
        return jnp.dtype(jnp.float32)
    try:
        kind = jax.devices()[0].device_kind.lower()
    except Exception:
        kind = ""
    if "v5 lite" in kind or "v5e" in kind or "v5lite" in kind:
        # v5e VPU/EUP have no bf16 datapath -> widen once instead of per-op.
        return jnp.dtype(jnp.float32)
    return jnp.dtype(x_dtype)


def _per_row_work_bytes(T, D, in_itemsize, compute_itemsize):
    """Per-batch-row VMEM working set: double-buffered input + ~2 compute-dtype
    (T, D) elementwise temporaries (+ an upcast copy when widening)."""
    per_row = T * D * (2 * in_itemsize + 2 * compute_itemsize)
    if compute_itemsize > in_itemsize:
        per_row += T * D * compute_itemsize
    return per_row


def _pick_block_b(T, D, in_itemsize, per_row_work):
    """Batch tile: multiple of 8, ~4 MiB HBM block per pipeline stage, working
    set comfortably inside a scoped-VMEM limit safe on v5e/v6e/v7x."""
    per_row_hbm = max(T * D * in_itemsize, 1)
    tb = (4 * 1024 * 1024) // per_row_hbm
    tb = min(tb, (28 * 1024 * 1024) // max(per_row_work, 1))
    tb = max(8, (tb // 8) * 8)
    return tb


def simple_self_attention(x, temperature=TEMPERATURE):
    """x: [B, T, D] -> [B, D] (squeeze=True path, mask=None, eval-mode dropout)."""
    B, T, D = x.shape
    in_itemsize = jnp.dtype(x.dtype).itemsize
    compute_dtype = _compute_dtype_for(x.dtype)
    compute_itemsize = jnp.dtype(compute_dtype).itemsize
    per_row_work = _per_row_work_bytes(T, D, in_itemsize, compute_itemsize)

    if B <= 8:
        # Tiny batch: one full-extent block (block dims == array dims is always
        # legal), no padding, grid of 1.
        tb = B
    else:
        tb = _pick_block_b(T, D, in_itemsize, per_row_work)
        # Guarantee >= 2 grid steps so v7x can shard the "parallel" batch axis
        # across both TensorCores (grid=(1,) idles one TC -> up to 2x loss).
        half = max(8, (((B + 1) // 2) // 8) * 8)
        tb = min(tb, half)

    grid = (pl.cdiv(B, tb),)  # ragged last block handled by Pallas, no jnp.pad

    # Scoped-VMEM budget: input double-buffer + widened temporaries + output
    # double-buffer + headroom; clamp to [32, 48] MiB — safe on v5e/v6e
    # (128 MiB physical VMEM) and v7x (64 MiB physical).
    work_bytes = tb * per_row_work + 4 * tb * D * 4 + (4 << 20)
    vmem_bytes = int(min(max(work_bytes, 32 << 20), 48 << 20))

    cost = pl.CostEstimate(
        flops=int(4 * B * T * D + 6 * B * T),
        transcendentals=int(B * T),
        bytes_accessed=int(B * T * D * in_itemsize + B * D * in_itemsize),
    )

    kernel = functools.partial(
        _self_attn_kernel,
        inv_temperature=float(1.0 / temperature),
        compute_dtype=compute_dtype,
    )

    return pl.pallas_call(
        kernel,
        out_shape=jax.ShapeDtypeStruct((B, D), x.dtype),
        grid_spec=pltpu.PrefetchScalarGridSpec(
            num_scalar_prefetch=0,
            grid=grid,
            in_specs=[pl.BlockSpec((tb, T, D), lambda b: (b, 0, 0))],
            out_specs=pl.BlockSpec((tb, D), lambda b: (b, 0)),
        ),
        compiler_params=pltpu.CompilerParams(
            dimension_semantics=("parallel",),
            vmem_limit_bytes=vmem_bytes,
        ),
        cost_estimate=cost,
    )(x)


def _reference(x, temperature=TEMPERATURE):
    # Pure-JAX reference mirroring the PyTorch forward.
    q = jnp.max(x, axis=1, keepdims=True)                   # (B, 1, D)
    attn = jnp.einsum("bqd,btd->bqt", q, x) / temperature   # (B, 1, T)
    attn = jax.nn.softmax(attn, axis=2)
    out = jnp.einsum("bqt,btd->bqd", attn, x)               # (B, 1, D)
    return out[:, 0, :]                                     # (B, D)


if __name__ == "__main__":
    key = jax.random.PRNGKey(0)
    B, T, D = 2, 8, 32
    x = jax.random.normal(key, (B, T, D), dtype=jnp.float32)

    out = simple_self_attention(x)
    jax.block_until_ready(out)

    ref = _reference(x)
    assert out.shape == (B, D)
    assert jnp.allclose(out, ref, atol=1e-4, rtol=1e-4), "mismatch vs reference"
    print("KERNEL_OK")
</pallas_src>

<mosaic_0001>
module attributes {stable_mosaic.version = 11 : i64} {
  func.func @_self_attn_kernel(%arg0: i32, %arg1: memref<2x8x32xf32, #tpu.memory_space<vmem>>, %arg2: memref<2x32xf32, #tpu.memory_space<vmem>>) attributes {dimension_semantics = [#tpu.dimension_semantics<parallel>], iteration_bounds = array<i64: 1>, scalar_prefetch = 0 : i64, scratch_operands = 0 : i64, tpu.core_type = #tpu.core_type<tc>, window_params = [{transform_indices = @transform_0, window_bounds = array<i64: 2, 8, 32>}, {transform_indices = @transform_1, window_bounds = array<i64: 2, 32>}]} {
    %c0 = arith.constant 0 : index
    %c0_0 = arith.constant 0 : index
    %c0_1 = arith.constant 0 : index
    %0 = vector.load %arg1[%c0, %c0_0, %c0_1] : memref<2x8x32xf32, #tpu.memory_space<vmem>>, vector<2x8x32xf32>
    %cst = arith.constant dense<0xFF800000> : vector<2x32xf32>
    %1 = vector.multi_reduction <maximumf>, %0, %cst [1] : vector<2x8x32xf32> to vector<2x32xf32>
    %2 = vector.shape_cast %1 : vector<2x32xf32> to vector<2x1x32xf32>
    %3 = vector.broadcast %2 : vector<2x1x32xf32> to vector<2x8x32xf32>
    %4 = arith.mulf %0, %3 : vector<2x8x32xf32>
    %cst_2 = arith.constant dense<0.000000e+00> : vector<2x8xf32>
    %5 = vector.multi_reduction <add>, %4, %cst_2 [2] : vector<2x8x32xf32> to vector<2x8xf32>
    %cst_3 = arith.constant dense<0xFF800000> : vector<2xf32>
    %6 = vector.multi_reduction <maximumf>, %5, %cst_3 [1] : vector<2x8xf32> to vector<2xf32>
    %7 = vector.shape_cast %6 : vector<2xf32> to vector<2x1xf32>
    %8 = vector.broadcast %7 : vector<2x1xf32> to vector<2x8xf32>
    %9 = arith.subf %5, %8 : vector<2x8xf32>
    %10 = math.exp %9 : vector<2x8xf32>
    %cst_4 = arith.constant dense<0.000000e+00> : vector<2xf32>
    %11 = vector.multi_reduction <add>, %10, %cst_4 [1] : vector<2x8xf32> to vector<2xf32>
    %12 = vector.shape_cast %11 : vector<2xf32> to vector<2x1xf32>
    %13 = vector.shape_cast %10 : vector<2x8xf32> to vector<2x8x1xf32>
    %14 = vector.broadcast %13 : vector<2x8x1xf32> to vector<2x8x32xf32>
    %15 = arith.mulf %14, %0 : vector<2x8x32xf32>
    %cst_5 = arith.constant dense<0.000000e+00> : vector<2x32xf32>
    %16 = vector.multi_reduction <add>, %15, %cst_5 [1] : vector<2x8x32xf32> to vector<2x32xf32>
    %17 = tpu.reciprocal %12 : vector<2x1xf32> -> vector<2x1xf32>
    %18 = vector.broadcast %17 : vector<2x1xf32> to vector<2x32xf32>
    %19 = arith.mulf %16, %18 : vector<2x32xf32>
    %c0_6 = arith.constant 0 : index
    %c0_7 = arith.constant 0 : index
    %20 = vector.load %arg2[%c0_6, %c0_7] : memref<2x32xf32, #tpu.memory_space<vmem>>, vector<2x32xf32>
    tpu.vector_store %arg2[%c0_6, %c0_7], %19 {strides = array<i32>} : memref<2x32xf32, #tpu.memory_space<vmem>>, vector<2x32xf32>,
    return
  }
  func.func @transform_0(%arg0: i32) -> (i32, i32, i32) {
    %c0_i32 = arith.constant 0 : i32
    %c0_i32_0 = arith.constant 0 : i32
    %c0_i32_1 = arith.constant 0 : i32
    return %arg0, %c0_i32, %c0_i32_0 : i32, i32, i32
  }
  func.func @transform_1(%arg0: i32) -> (i32, i32) {
    %c0_i32 = arith.constant 0 : i32
    %c0_i32_0 = arith.constant 0 : i32
    return %arg0, %c0_i32 : i32, i32
  }
}

</mosaic_0001>

<llo_original>
// kernel: tpu_custom_call.1
$region0: #{tpu_custom_call.1}
  #allocation0 [shape = 'u32[]', space=smem, size = 0x4, offset = 0x4, fixed_abs, tag = 'smem constant byte address 0x4 - core index']
  #allocation1 [shape = 'u32[144,128]{1,0:T(1,128)}', space=vmem, size = 0x12000, scoped, tag = 'internal scratch']
  %s0 = inlined_call_operand.hbm [shape: f32[2,8,32], index: 0, kind: input, shape index: {}]
  %s1 = inlined_call_operand.hbm [shape: f32[2,32], index: 1, kind: output, shape index: {}]
  %s2 = sld [smem:[#allocation0]]
  $region18: #{tpu_custom_call.1} parent=0
    _
  %s4 = ssub.s32 1, %s2
  %s5 = scalar_select 0, %s4, %s2
  $region1: #{tpu_custom_call.1} parent=0
    #allocation2 [shape = 'u8[8192]{0}', space=vmem, size = 0x2000, scoped, tag = 'input window, operand 0, single buffered']
    #allocation3 [shape = 's32[1]{0}', space=sflag, size = 0x4, scoped, tag = 'scoped memory for tpu_custom_call.1']
    #allocation4 [shape = 's32[1]{0}', space=sflag, size = 0x4, scoped, tag = 'scoped memory for tpu_custom_call.1']
    #allocation5 [shape = 'u8[1024]{0}', space=vmem, size = 0x400, scoped, tag = 'output window, operand 0, single buffered']
    %6 = vsyncpa [#allocation3], 0
    %7 = vsyncpa [#allocation4], 0
    // Predicated region
    $region2: #{tpu_custom_call.1} parent=1 // pred_check
      _
    $region3: #{tpu_custom_call.1} parent=1 // pred_check_branch
      %9 = sbr.rel (0) target = $region5
    $region4: #{tpu_custom_call.1} parent=1 // pred_region
      %s11 = ssub.s32 256, 256
      %12 = vsyncadd [#allocation3], %s11
      %s13 = sshll.u32 [#allocation2], 4
      %s14 = int_to_ptr.vmem [resolvable:$true] %s13
      %19 = dma.hbm_to_vmem [thread:$0]  %s0, 256, %s14, [#allocation3], 128, 128, 8
    $region5: #{tpu_custom_call.1} parent=1 // pred_fallthru
      _
    // Predicated region
    $region6: #{tpu_custom_call.1} parent=1 // pred_check
      _
    $region7: #{tpu_custom_call.1} parent=1 // pred_check_branch
      %21 = sbr.rel (0) target = $region9
    $region8: #{tpu_custom_call.1} parent=1 // pred_region
      %22 = dma.done [#allocation3], 256
    $region9: #{tpu_custom_call.1} parent=1 // pred_fallthru
      _
    %v23 = vld [vmem:[#allocation2] sm:$0xff]
    %v24 = vld [vmem:[#allocation2 + $0x8] sm:$0xff]
    %vm25 = vcmask 261120
    %v26 = vsel %vm25, %v23, -inf
    %v27 = vrot.slane %v26, 4
    %v28 = vmax.f32 %v26, %v27
    %v29 = vrot.slane %v28, 2
    %v30 = vmax.f32 %v28, %v29
    %v31 = vrot.slane %v30, 1
    %v32 = vmax.f32 %v30, %v31
    %v33 = vsel %vm25, %v24, -inf
    %v34 = vrot.slane %v33, 4
    %v35 = vmax.f32 %v33, %v34
    %v36 = vrot.slane %v35, 2
    %v37 = vmax.f32 %v35, %v36
    %v38 = vrot.slane %v37, 1
    %v39 = vmax.f32 %v37, %v38
    %v40 = vmul.f32 %v23, %v32
    %v41 = vmul.f32 %v24, %v39
    %v42 = vsel %vm25, %v40, 0.0
    %43 = vadd.xlane.f32.xlu0 %v42
    %v44 = vpop.xlane.xlu0 %43
    %v45 = vsel %vm25, %v41, 0.0
    %46 = vadd.xlane.f32.xlu0 %v45
    %v47 = vpop.xlane.xlu0 %46
    %v50 = vlaneseq
    %v51 = vand.u32 %v50, 127
    %v52 = vlaneseq
    %v53 = vshrl.u32 %v52, 7
    %v54 = vsub.s32 %v51, %v53
    %v55 = vrot.slane %v44, %v54
    %v56 = vlaneseq
    %v57 = vshrl.u32 %v56, 7
    %v58 = vsub.s32 %v51, %v57
    %v59 = vrot.slane %v47, %v58
    %vm60 = vcmask 1041409
    %v61 = vsel %vm60, %v59, %v55
    %vm63 = vcmask 58368
    %v64 = vsel %vm63, %v61, -inf
    %65 = vmax.xlane.f32.xlu0 %v64
    %v66 = vpop.xlane.xlu0 %65
    %v68 = vlaneseq
    %v69 = vshrl.u32 %v68, 7
    %v70 = vsub.s32 0, %v69
    %v71 = vrot.slane %v66, %v70
    %v72 = vlaneseq
    %v73 = vshrl.u32 %v72, 7
    %v74 = vsub.s32 1, %v73
    %v75 = vrot.slane %v66, %v74
    %v78 = vsub.f32 %v44, %v71
    %v79 = vsub.f32 %v47, %v75
    %v80 = vmul.f32 %v78, 1.442695
    %v81 = vpow.pop %v80
    %v82 = vmul.f32 %v79, 1.442695
    %v83 = vpow.pop %v82
    %86 = vset.pattern.permute.xlu0 0
    %87 = vperm.xlu0 %86, %v81
    %v88 = vpop.permute.xlu0 %87
    %89 = vset.pattern.permute.xlu0 0
    %90 = vperm.xlu0 %89, %v83
    %v91 = vpop.permute.xlu0 %90
    %v92 = vlaneseq
    %v93 = vshrl.u32 %v92, 7
    %v94 = vsub.s32 %v51, %v93
    %v95 = vrot.slane %v88, %v94
    %v96 = vlaneseq
    %v97 = vshrl.u32 %v96, 7
    %v98 = vsub.s32 %v51, %v97
    %v99 = vrot.slane %v91, %v98
    %v100 = vsel %vm60, %v99, %v95
    %v102 = vsel %vm63, %v100, 0.0
    %103 = vadd.xlane.f32.xlu0 %v102
    %v104 = vpop.xlane.xlu0 %103
    %v107 = vmul.f32 %v88, %v23
    %v108 = vmul.f32 %v91, %v24
    %v109 = vsel %vm25, %v107, 0.0
    %v110 = vrot.slane %v109, 4
    %v111 = vadd.f32 %v109, %v110
    %v112 = vrot.slane %v111, 2
    %v113 = vadd.f32 %v111, %v112
    %v114 = vrot.slane %v113, 1
    %v115 = vadd.f32 %v113, %v114
    %v116 = vsel %vm25, %v108, 0.0
    %v117 = vrot.slane %v116, 4
    %v118 = vadd.f32 %v116, %v117
    %v119 = vrot.slane %v118, 2
    %v120 = vadd.f32 %v118, %v119
    %v121 = vrot.slane %v120, 1
    %v122 = vadd.f32 %v120, %v121
    %v123 = vrcp.pop %v104
    %v125 = vrot.slane %v123, 1
    %v128 = vmul.f32 %v115, %v123
    %v129 = vmul.f32 %v122, %v125
    %v132 = vrot.slane %v129, 7
    %v133 = vsel %vm60, %v132, %v128
    %vm135 = vcmask 254976
    %136 = vst.msk [vmem:[#allocation5] sm:$0x3] %vm135, %v133
    // Predicated region
    $region10: #{tpu_custom_call.1} parent=1 // pred_check
      _
    $region11: #{tpu_custom_call.1} parent=1 // pred_check_branch
      %138 = sbr.rel (0) target = $region13
    $region12: #{tpu_custom_call.1} parent=1 // pred_region
      %s140 = ssub.s32 32, 32
      %141 = vsyncadd [#allocation4], %s140
      %s143 = sshll.u32 [#allocation5], 4
      %s144 = int_to_ptr.vmem [resolvable:$true] %s143
      %146 = dma.vmem_to_hbm [thread:$0]  %s144, 32, %s1, [#allocation4]
    $region13: #{tpu_custom_call.1} parent=1 // pred_fallthru
      _
    // Predicated region
    $region14: #{tpu_custom_call.1} parent=1 // pred_check
      _
    $region15: #{tpu_custom_call.1} parent=1 // pred_check_branch
      %148 = sbr.rel (0) target = $region17
    $region16: #{tpu_custom_call.1} parent=1 // pred_region
      %149 = dma.done [#allocation4], 32
    $region17: #{tpu_custom_call.1} parent=1 // pred_fallthru
      _
    %150 = vsyncpa [#allocation3], 1
    %151 = vsyncpa [#allocation4], 1

</llo_original>
